<compile_context>
chip_gen: v7x
topology: tpu7x:2x2x1
jax: 0.10.0
libtpu: 0.0.40
codegen_flags: <defaults>
</compile_context>

<pallas_src>
import numpy as np
import jax
import jax.numpy as jnp
from jax.experimental import pallas as pl
from jax.experimental.pallas import tpu as pltpu

DIM = 4     # channels
H = 16      # spatial height
W = 16      # spatial width
N = 2       # batch
EPS = 1e-5  # nn.InstanceNorm2d default eps

# TODO(synk): nn.Dropout(0.25) branch omitted (use_dropout=False; identity in eval mode).


def _refl(t, n):
    """Reflection index for pad=1 (matches nn.ReflectionPad2d / np.pad 'reflect')."""
    if t < 0:
        return -t
    if t >= n:
        return 2 * n - 2 - t
    return t


def resnet_block_kernel(x_ref, band1_ref, band2_ref, bias1_ref, bias2_ref,
                        pool_ref, unpool_ref, o_ref):
    x = x_ref[...]                 # [H, NWC]   (NWC = N*W*C = 128 lanes)
    pool = pool_ref[...]           # [NWC, NC]  per-(batch, channel) pooling (0/1)
    unpool = unpool_ref[...]       # [NC, NWC]  broadcast channel value back to lanes
    h = x.shape[0]
    w_spatial = pool.shape[0] // pool.shape[1]          # = W
    inv_count = 1.0 / (h * w_spatial)                   # 1 / (H*W)
    row_idx = jax.lax.broadcasted_iota(jnp.int32, (h, 1), 0)

    def shifted_cat(z):
        # Reflect-padded kernel-height taps on the XLU (roll) + VPU (select).
        up = pltpu.roll(z, shift=1, axis=0)                       # up[i] = z[i-1]
        up = jnp.where(row_idx == 0, z[1:2, :], up)               # reflect: row 0 -> z[1]
        dn = pltpu.roll(z, shift=h - 1, axis=0)                   # dn[i] = z[i+1]
        dn = jnp.where(row_idx == h - 1, z[h - 2:h - 1, :], dn)   # reflect: row H-1 -> z[H-2]
        return jnp.concatenate([up, z, dn], axis=1)               # [H, 3*NWC]

    def conv3x3(z, band_ref, bias_ref):
        # Single fused MXU matmul, K = 3*NWC, over all taps / channels / columns.
        return jnp.dot(shifted_cat(z), band_ref[...],
                       preferred_element_type=jnp.float32) + bias_ref[...]

    def instance_norm(y):
        # Fused stats: one pool matmul for (sum, sum_sq), one unpool matmul
        # for the broadcast (scale, shift) coefficients.  Stats stay in f32.
        s1 = jnp.sum(y, axis=0, keepdims=True)                    # [1, NWC]
        s2 = jnp.sum(y * y, axis=0, keepdims=True)                # [1, NWC]
        sums = jnp.dot(jnp.concatenate([s1, s2], axis=0), pool,
                       preferred_element_type=jnp.float32) * inv_count    # [2, NC]
        mean = sums[0:1, :]
        var = sums[1:2, :] - mean * mean                          # biased variance
        inv_std = jax.lax.rsqrt(var + EPS)
        coeffs = jnp.concatenate([inv_std, -mean * inv_std], axis=0)      # [2, NC]
        bc = jnp.dot(coeffs, unpool, preferred_element_type=jnp.float32)  # [2, NWC]
        return y * bc[0:1, :] + bc[1:2, :]

    y = conv3x3(x, band1_ref, bias1_ref)
    y = jnp.maximum(instance_norm(y), 0.0)                        # ReLU
    y = conv3x3(y, band2_ref, bias2_ref)
    o_ref[...] = x + instance_norm(y)                             # residual skip


def resnet_block_pallas(x_nchw, w1, b1, w2, b2):
    n, c, h, w = x_nchw.shape
    nwc = n * w * c
    nc = n * c

    # ---- host-side constant / weight preprocessing (glue, no FLOPs on TPU) ----
    def band_all(w_oihw):
        """[3*NWC, NWC] matrix folding row-tap selection, column reflect-pad shifts
        and Cin->Cout mixing, block-diagonal over the batch dimension."""
        w_np = np.asarray(w_oihw, np.float32)            # [Cout, Cin, 3, 3]
        out = np.zeros((3 * nwc, nwc), np.float32)
        for kh in range(3):
            blk = np.zeros((w * c, w * c), np.float32)
            for j in range(w):
                for kw in range(3):
                    jp = _refl(j + kw - 1, w)
                    # rows indexed by (jp, ci), cols by (j, co)
                    blk[jp * c:(jp + 1) * c, j * c:(j + 1) * c] += w_np[:, :, kh, kw].T
            out[kh * nwc:(kh + 1) * nwc, :] = np.kron(np.eye(n, dtype=np.float32), blk)
        return out

    band1 = band_all(w1)
    band2 = band_all(w2)
    bias1 = np.tile(np.asarray(b1, np.float32), n * w)[None, :]     # [1, NWC]
    bias2 = np.tile(np.asarray(b2, np.float32), n * w)[None, :]
    pool = np.kron(np.eye(n, dtype=np.float32),
                   np.tile(np.eye(c, dtype=np.float32), (w, 1)))    # [NWC, NC]
    unpool = pool.T.copy()                                          # [NC, NWC]

    # layout: NCHW -> [H, N, W, C] -> [H, N*W*C]  (batch packed into lanes)
    x2 = jnp.transpose(x_nchw, (2, 0, 3, 1)).reshape(h, nwc).astype(jnp.float32)

    vmem = pl.BlockSpec(memory_space=pltpu.MemorySpace.VMEM)        # whole array in VMEM
    out2 = pl.pallas_call(
        resnet_block_kernel,
        out_shape=jax.ShapeDtypeStruct((h, nwc), jnp.float32),
        in_specs=[vmem] * 7,
        out_specs=vmem,
    )(x2, jnp.asarray(band1), jnp.asarray(band2),
      jnp.asarray(bias1), jnp.asarray(bias2),
      jnp.asarray(pool), jnp.asarray(unpool))

    # [H, N*W*C] -> [H, N, W, C] -> NCHW
    return jnp.transpose(out2.reshape(h, n, w, c), (1, 3, 0, 2))


def reference(x, w1, b1, w2, b2):
    """Pure-JAX reference matching the PyTorch module semantics."""
    def conv(z, wt, bs):
        zp = jnp.pad(z, ((0, 0), (0, 0), (1, 1), (1, 1)), mode="reflect")
        y = jax.lax.conv_general_dilated(
            zp, wt, window_strides=(1, 1), padding="VALID",
            dimension_numbers=("NCHW", "OIHW", "NCHW"),
            precision=jax.lax.Precision.HIGHEST)
        return y + bs[None, :, None, None]

    def inorm(z):
        m = jnp.mean(z, axis=(2, 3), keepdims=True)
        v = jnp.mean((z - m) ** 2, axis=(2, 3), keepdims=True)
        return (z - m) * jax.lax.rsqrt(v + EPS)

    y = jnp.maximum(inorm(conv(x, w1, b1)), 0.0)
    y = inorm(conv(y, w2, b2))
    return x + y


if __name__ == "__main__":
    key = jax.random.PRNGKey(0)
    kx, k1, k2, k3, k4 = jax.random.split(key, 5)
    x = jax.random.normal(kx, (N, DIM, H, W), jnp.float32)
    # deterministic synthetic parameters (Conv2d: [Cout, Cin, 3, 3] + bias [Cout])
    w1 = 0.2 * jax.random.normal(k1, (DIM, DIM, 3, 3), jnp.float32)
    b1 = 0.1 * jax.random.normal(k2, (DIM,), jnp.float32)
    w2 = 0.2 * jax.random.normal(k3, (DIM, DIM, 3, 3), jnp.float32)
    b2 = 0.1 * jax.random.normal(k4, (DIM,), jnp.float32)

    out = resnet_block_pallas(x, w1, b1, w2, b2)
    out = jax.block_until_ready(out)

    ref = reference(x, w1, b1, w2, b2)
    assert out.shape == (N, DIM, H, W)
    max_err = float(jnp.max(jnp.abs(out - ref)))
    assert jnp.allclose(out, ref, atol=2e-3, rtol=2e-3), f"max_err={max_err}"
    print("KERNEL_OK")
</pallas_src>

<mosaic_0001>
module attributes {stable_mosaic.version = 11 : i64} {
  func.func @resnet_block_kernel(%arg0: memref<16x128xf32, #tpu.memory_space<vmem>>, %arg1: memref<384x128xf32, #tpu.memory_space<vmem>>, %arg2: memref<384x128xf32, #tpu.memory_space<vmem>>, %arg3: memref<1x128xf32, #tpu.memory_space<vmem>>, %arg4: memref<1x128xf32, #tpu.memory_space<vmem>>, %arg5: memref<128x8xf32, #tpu.memory_space<vmem>>, %arg6: memref<8x128xf32, #tpu.memory_space<vmem>>, %arg7: memref<16x128xf32, #tpu.memory_space<vmem>>) attributes {dimension_semantics = [], scalar_prefetch = 0 : i64, scratch_operands = 0 : i64, tpu.core_type = #tpu.core_type<tc>} {
    %c0 = arith.constant 0 : index
    %c0_0 = arith.constant 0 : index
    %0 = vector.load %arg0[%c0, %c0_0] : memref<16x128xf32, #tpu.memory_space<vmem>>, vector<16x128xf32>
    %c0_1 = arith.constant 0 : index
    %c0_2 = arith.constant 0 : index
    %1 = vector.load %arg5[%c0_1, %c0_2] : memref<128x8xf32, #tpu.memory_space<vmem>>, vector<128x8xf32>
    %c0_3 = arith.constant 0 : index
    %c0_4 = arith.constant 0 : index
    %2 = vector.load %arg6[%c0_3, %c0_4] : memref<8x128xf32, #tpu.memory_space<vmem>>, vector<8x128xf32>
    %3 = tpu.iota {dimensions = array<i32: 0>} : vector<16x1xi32>
    %c1_i32 = arith.constant 1 : i32
    %4 = tpu.dynamic_rotate %0 by %c1_i32 dim 0 : vector<16x128xf32>, i32 -> vector<16x128xf32>
    %c0_i32 = arith.constant 0 : i32
    %5 = vector.broadcast %c0_i32 : i32 to vector<16x1xi32>
    %6 = arith.cmpi eq, %3, %5 : vector<16x1xi32>
    %7 = vector.extract_strided_slice %0 {offsets = [1, 0], sizes = [1, 128], strides = [1, 1]} : vector<16x128xf32> to vector<1x128xf32>
    %8 = vector.shape_cast %6 : vector<16x1xi1> to vector<16x1xi1>
    %9 = vector.broadcast %8 : vector<16x1xi1> to vector<16x128xi1>
    %10 = vector.shape_cast %7 : vector<1x128xf32> to vector<1x128xf32>
    %11 = vector.broadcast %10 : vector<1x128xf32> to vector<16x128xf32>
    %12 = arith.select %9, %11, %4 : vector<16x128xi1>, vector<16x128xf32>
    %c15_i32 = arith.constant 15 : i32
    %13 = tpu.dynamic_rotate %0 by %c15_i32 dim 0 : vector<16x128xf32>, i32 -> vector<16x128xf32>
    %c15_i32_5 = arith.constant 15 : i32
    %14 = vector.broadcast %c15_i32_5 : i32 to vector<16x1xi32>
    %15 = arith.cmpi eq, %3, %14 : vector<16x1xi32>
    %16 = vector.extract_strided_slice %0 {offsets = [14, 0], sizes = [1, 128], strides = [1, 1]} : vector<16x128xf32> to vector<1x128xf32>
    %17 = vector.shape_cast %15 : vector<16x1xi1> to vector<16x1xi1>
    %18 = vector.broadcast %17 : vector<16x1xi1> to vector<16x128xi1>
    %19 = vector.shape_cast %16 : vector<1x128xf32> to vector<1x128xf32>
    %20 = vector.broadcast %19 : vector<1x128xf32> to vector<16x128xf32>
    %21 = arith.select %18, %20, %13 : vector<16x128xi1>, vector<16x128xf32>
    %22 = tpu.concatenate %12, %0, %21 in 1 : vector<16x128xf32>, vector<16x128xf32>, vector<16x128xf32> -> vector<16x384xf32>
    %c0_6 = arith.constant 0 : index
    %c0_7 = arith.constant 0 : index
    %23 = vector.load %arg1[%c0_6, %c0_7] : memref<384x128xf32, #tpu.memory_space<vmem>>, vector<384x128xf32>
    %cst = arith.constant dense<0.000000e+00> : vector<16x128xf32>
    %24 = tpu.matmul %22, %23, %cst {dimension_numbers = #tpu.dot_dimension_numbers<[1], [0], [0], [1], [0, 0, 1, 1], [], []>} : vector<16x384xf32>, vector<384x128xf32>, vector<16x128xf32> -> vector<16x128xf32>
    %c0_8 = arith.constant 0 : index
    %c0_9 = arith.constant 0 : index
    %25 = vector.load %arg3[%c0_8, %c0_9] : memref<1x128xf32, #tpu.memory_space<vmem>>, vector<1x128xf32>
    %26 = vector.broadcast %25 : vector<1x128xf32> to vector<16x128xf32>
    %27 = arith.addf %24, %26 : vector<16x128xf32>
    %cst_10 = arith.constant dense<0.000000e+00> : vector<128xf32>
    %28 = vector.multi_reduction <add>, %27, %cst_10 [0] : vector<16x128xf32> to vector<128xf32>
    %29 = vector.shape_cast %28 : vector<128xf32> to vector<1x128xf32>
    %30 = arith.mulf %27, %27 : vector<16x128xf32>
    %cst_11 = arith.constant dense<0.000000e+00> : vector<128xf32>
    %31 = vector.multi_reduction <add>, %30, %cst_11 [0] : vector<16x128xf32> to vector<128xf32>
    %32 = vector.shape_cast %31 : vector<128xf32> to vector<1x128xf32>
    %33 = tpu.concatenate %29, %32 in 0 : vector<1x128xf32>, vector<1x128xf32> -> vector<2x128xf32>
    %cst_12 = arith.constant dense<0.000000e+00> : vector<2x8xf32>
    %34 = tpu.matmul %33, %1, %cst_12 {dimension_numbers = #tpu.dot_dimension_numbers<[1], [0], [0], [1], [0, 0, 1, 1], [], []>} : vector<2x128xf32>, vector<128x8xf32>, vector<2x8xf32> -> vector<2x8xf32>
    %cst_13 = arith.constant 3.906250e-03 : f32
    %35 = vector.broadcast %cst_13 : f32 to vector<2x8xf32>
    %36 = arith.mulf %34, %35 : vector<2x8xf32>
    %37 = vector.extract_strided_slice %36 {offsets = [0, 0], sizes = [1, 8], strides = [1, 1]} : vector<2x8xf32> to vector<1x8xf32>
    %38 = vector.extract_strided_slice %36 {offsets = [1, 0], sizes = [1, 8], strides = [1, 1]} : vector<2x8xf32> to vector<1x8xf32>
    %39 = arith.mulf %37, %37 : vector<1x8xf32>
    %40 = arith.subf %38, %39 : vector<1x8xf32>
    %cst_14 = arith.constant 9.99999974E-6 : f32
    %41 = vector.broadcast %cst_14 : f32 to vector<1x8xf32>
    %42 = arith.addf %40, %41 : vector<1x8xf32>
    %43 = math.rsqrt %42 : vector<1x8xf32>
    %cst_15 = arith.constant 0.000000e+00 : f32
    %44 = vector.broadcast %cst_15 : f32 to vector<1x8xf32>
    %45 = arith.subf %44, %37 : vector<1x8xf32>
    %46 = arith.mulf %45, %43 : vector<1x8xf32>
    %47 = tpu.concatenate %43, %46 in 0 : vector<1x8xf32>, vector<1x8xf32> -> vector<2x8xf32>
    %cst_16 = arith.constant dense<0.000000e+00> : vector<2x128xf32>
    %48 = tpu.matmul %47, %2, %cst_16 {dimension_numbers = #tpu.dot_dimension_numbers<[1], [0], [0], [1], [0, 0, 1, 1], [], []>} : vector<2x8xf32>, vector<8x128xf32>, vector<2x128xf32> -> vector<2x128xf32>
    %49 = vector.extract_strided_slice %48 {offsets = [0, 0], sizes = [1, 128], strides = [1, 1]} : vector<2x128xf32> to vector<1x128xf32>
    %50 = vector.broadcast %49 : vector<1x128xf32> to vector<16x128xf32>
    %51 = arith.mulf %27, %50 : vector<16x128xf32>
    %52 = vector.extract_strided_slice %48 {offsets = [1, 0], sizes = [1, 128], strides = [1, 1]} : vector<2x128xf32> to vector<1x128xf32>
    %53 = vector.broadcast %52 : vector<1x128xf32> to vector<16x128xf32>
    %54 = arith.addf %51, %53 : vector<16x128xf32>
    %cst_17 = arith.constant 0.000000e+00 : f32
    %55 = vector.broadcast %cst_17 : f32 to vector<16x128xf32>
    %56 = arith.maximumf %54, %55 : vector<16x128xf32>
    %c1_i32_18 = arith.constant 1 : i32
    %57 = tpu.dynamic_rotate %56 by %c1_i32_18 dim 0 : vector<16x128xf32>, i32 -> vector<16x128xf32>
    %c0_i32_19 = arith.constant 0 : i32
    %58 = vector.broadcast %c0_i32_19 : i32 to vector<16x1xi32>
    %59 = arith.cmpi eq, %3, %58 : vector<16x1xi32>
    %60 = vector.extract_strided_slice %56 {offsets = [1, 0], sizes = [1, 128], strides = [1, 1]} : vector<16x128xf32> to vector<1x128xf32>
    %61 = vector.shape_cast %59 : vector<16x1xi1> to vector<16x1xi1>
    %62 = vector.broadcast %61 : vector<16x1xi1> to vector<16x128xi1>
    %63 = vector.shape_cast %60 : vector<1x128xf32> to vector<1x128xf32>
    %64 = vector.broadcast %63 : vector<1x128xf32> to vector<16x128xf32>
    %65 = arith.select %62, %64, %57 : vector<16x128xi1>, vector<16x128xf32>
    %c15_i32_20 = arith.constant 15 : i32
    %66 = tpu.dynamic_rotate %56 by %c15_i32_20 dim 0 : vector<16x128xf32>, i32 -> vector<16x128xf32>
    %c15_i32_21 = arith.constant 15 : i32
    %67 = vector.broadcast %c15_i32_21 : i32 to vector<16x1xi32>
    %68 = arith.cmpi eq, %3, %67 : vector<16x1xi32>
    %69 = vector.extract_strided_slice %56 {offsets = [14, 0], sizes = [1, 128], strides = [1, 1]} : vector<16x128xf32> to vector<1x128xf32>
    %70 = vector.shape_cast %68 : vector<16x1xi1> to vector<16x1xi1>
    %71 = vector.broadcast %70 : vector<16x1xi1> to vector<16x128xi1>
    %72 = vector.shape_cast %69 : vector<1x128xf32> to vector<1x128xf32>
    %73 = vector.broadcast %72 : vector<1x128xf32> to vector<16x128xf32>
    %74 = arith.select %71, %73, %66 : vector<16x128xi1>, vector<16x128xf32>
    %75 = tpu.concatenate %65, %56, %74 in 1 : vector<16x128xf32>, vector<16x128xf32>, vector<16x128xf32> -> vector<16x384xf32>
    %c0_22 = arith.constant 0 : index
    %c0_23 = arith.constant 0 : index
    %76 = vector.load %arg2[%c0_22, %c0_23] : memref<384x128xf32, #tpu.memory_space<vmem>>, vector<384x128xf32>
    %cst_24 = arith.constant dense<0.000000e+00> : vector<16x128xf32>
    %77 = tpu.matmul %75, %76, %cst_24 {dimension_numbers = #tpu.dot_dimension_numbers<[1], [0], [0], [1], [0, 0, 1, 1], [], []>} : vector<16x384xf32>, vector<384x128xf32>, vector<16x128xf32> -> vector<16x128xf32>
    %c0_25 = arith.constant 0 : index
    %c0_26 = arith.constant 0 : index
    %78 = vector.load %arg4[%c0_25, %c0_26] : memref<1x128xf32, #tpu.memory_space<vmem>>, vector<1x128xf32>
    %79 = vector.broadcast %78 : vector<1x128xf32> to vector<16x128xf32>
    %80 = arith.addf %77, %79 : vector<16x128xf32>
    %cst_27 = arith.constant dense<0.000000e+00> : vector<128xf32>
    %81 = vector.multi_reduction <add>, %80, %cst_27 [0] : vector<16x128xf32> to vector<128xf32>
    %82 = vector.shape_cast %81 : vector<128xf32> to vector<1x128xf32>
    %83 = arith.mulf %80, %80 : vector<16x128xf32>
    %cst_28 = arith.constant dense<0.000000e+00> : vector<128xf32>
    %84 = vector.multi_reduction <add>, %83, %cst_28 [0] : vector<16x128xf32> to vector<128xf32>
    %85 = vector.shape_cast %84 : vector<128xf32> to vector<1x128xf32>
    %86 = tpu.concatenate %82, %85 in 0 : vector<1x128xf32>, vector<1x128xf32> -> vector<2x128xf32>
    %cst_29 = arith.constant dense<0.000000e+00> : vector<2x8xf32>
    %87 = tpu.matmul %86, %1, %cst_29 {dimension_numbers = #tpu.dot_dimension_numbers<[1], [0], [0], [1], [0, 0, 1, 1], [], []>} : vector<2x128xf32>, vector<128x8xf32>, vector<2x8xf32> -> vector<2x8xf32>
    %cst_30 = arith.constant 3.906250e-03 : f32
    %88 = vector.broadcast %cst_30 : f32 to vector<2x8xf32>
    %89 = arith.mulf %87, %88 : vector<2x8xf32>
    %90 = vector.extract_strided_slice %89 {offsets = [0, 0], sizes = [1, 8], strides = [1, 1]} : vector<2x8xf32> to vector<1x8xf32>
    %91 = vector.extract_strided_slice %89 {offsets = [1, 0], sizes = [1, 8], strides = [1, 1]} : vector<2x8xf32> to vector<1x8xf32>
    %92 = arith.mulf %90, %90 : vector<1x8xf32>
    %93 = arith.subf %91, %92 : vector<1x8xf32>
    %cst_31 = arith.constant 9.99999974E-6 : f32
    %94 = vector.broadcast %cst_31 : f32 to vector<1x8xf32>
    %95 = arith.addf %93, %94 : vector<1x8xf32>
    %96 = math.rsqrt %95 : vector<1x8xf32>
    %cst_32 = arith.constant 0.000000e+00 : f32
    %97 = vector.broadcast %cst_32 : f32 to vector<1x8xf32>
    %98 = arith.subf %97, %90 : vector<1x8xf32>
    %99 = arith.mulf %98, %96 : vector<1x8xf32>
    %100 = tpu.concatenate %96, %99 in 0 : vector<1x8xf32>, vector<1x8xf32> -> vector<2x8xf32>
    %cst_33 = arith.constant dense<0.000000e+00> : vector<2x128xf32>
    %101 = tpu.matmul %100, %2, %cst_33 {dimension_numbers = #tpu.dot_dimension_numbers<[1], [0], [0], [1], [0, 0, 1, 1], [], []>} : vector<2x8xf32>, vector<8x128xf32>, vector<2x128xf32> -> vector<2x128xf32>
    %102 = vector.extract_strided_slice %101 {offsets = [0, 0], sizes = [1, 128], strides = [1, 1]} : vector<2x128xf32> to vector<1x128xf32>
    %103 = vector.broadcast %102 : vector<1x128xf32> to vector<16x128xf32>
    %104 = arith.mulf %80, %103 : vector<16x128xf32>
    %105 = vector.extract_strided_slice %101 {offsets = [1, 0], sizes = [1, 128], strides = [1, 1]} : vector<2x128xf32> to vector<1x128xf32>
    %106 = vector.broadcast %105 : vector<1x128xf32> to vector<16x128xf32>
    %107 = arith.addf %104, %106 : vector<16x128xf32>
    %108 = arith.addf %0, %107 : vector<16x128xf32>
    %c0_34 = arith.constant 0 : index
    %c0_35 = arith.constant 0 : index
    %109 = vector.load %arg7[%c0_34, %c0_35] : memref<16x128xf32, #tpu.memory_space<vmem>>, vector<16x128xf32>
    tpu.vector_store %arg7[%c0_34, %c0_35], %108 {strides = array<i32>} : memref<16x128xf32, #tpu.memory_space<vmem>>, vector<16x128xf32>,
    return
  }
}

</mosaic_0001>

<llo_original>
// kernel: tpu_custom_call.1
$region0: #{tpu_custom_call.1}
  #allocation0 [shape = 'u32[]', space=smem, size = 0x4, offset = 0x4, fixed_abs, tag = 'smem constant byte address 0x4 - core index']
  #allocation1 [shape = 'u32[144,128]{1,0:T(1,128)}', space=vmem, size = 0x12000, scoped, tag = 'internal scratch']
  %s0 = inlined_call_operand.vmem [shape: f32[16,128], index: 0, kind: input, shape index: {}]
  %s1 = inlined_call_operand.hbm [shape: f32[384,128], index: 1, kind: input, shape index: {}]
  %s2 = inlined_call_operand.hbm [shape: f32[384,128], index: 2, kind: input, shape index: {}]
  %s3 = inlined_call_operand.vmem [shape: f32[1,128], index: 3, kind: input, shape index: {}]
  %s4 = inlined_call_operand.vmem [shape: f32[1,128], index: 4, kind: input, shape index: {}]
  %s5 = inlined_call_operand.vmem [shape: f32[128,8], index: 5, kind: input, shape index: {}]
  %s6 = inlined_call_operand.vmem [shape: f32[8,128], index: 6, kind: input, shape index: {}]
  %s7 = inlined_call_operand.hbm [shape: f32[16,128], index: 7, kind: output, shape index: {}]
  %s8 = sld [smem:[#allocation0]]
  $region46: #{tpu_custom_call.1} parent=0
    _
  %s10 = ssub.s32 1, %s8
  %s11 = scalar_select 0, %s10, %s8
  $region1: #{tpu_custom_call.1} parent=0
    #allocation2 [shape = 'u8[196608]{0}', space=vmem, size = 0x30000, scoped, tag = 'input window, operand 1, single buffered']
    #allocation3 [shape = 's32[1]{0}', space=sflag, size = 0x4, scoped, tag = 'scoped memory for tpu_custom_call.1']
    #allocation4 [shape = 's32[1]{0}', space=sflag, size = 0x4, scoped, tag = 'scoped memory for tpu_custom_call.1']
    #allocation5 [shape = 'u8[196608]{0}', space=vmem, size = 0x30000, scoped, tag = 'input window, operand 2, single buffered']
    #allocation6 [shape = 's32[1]{0}', space=sflag, size = 0x4, scoped, tag = 'scoped memory for tpu_custom_call.1']
    #allocation7 [shape = 'u8[8192]{0}', space=vmem, size = 0x2000, scoped, tag = 'output window, operand 0, single buffered']
    %12 = vsyncpa [#allocation3], 0
    %13 = vsyncpa [#allocation6], 0
    %14 = vsyncpa [#allocation4], 0
    // Predicated region
    $region2: #{tpu_custom_call.1} parent=1 // pred_check
      _
    $region3: #{tpu_custom_call.1} parent=1 // pred_check_branch
      %16 = sbr.rel (0) target = $region5
    $region4: #{tpu_custom_call.1} parent=1 // pred_region
      _
    $region5: #{tpu_custom_call.1} parent=1 // pred_fallthru
      _
    // Predicated region
    $region6: #{tpu_custom_call.1} parent=1 // pred_check
      _
    $region7: #{tpu_custom_call.1} parent=1 // pred_check_branch
      %18 = sbr.rel (0) target = $region9
    $region8: #{tpu_custom_call.1} parent=1 // pred_region
      %s20 = ssub.s32 6144, 6144
      %21 = vsyncadd [#allocation3], %s20
      %s22 = sshll.u32 [#allocation2], 4
      %s23 = int_to_ptr.vmem [resolvable:$true] %s22
      %28 = dma.hbm_to_vmem [thread:$0]  %s1, 6144, %s23, [#allocation3], 128, 128, 8
    $region9: #{tpu_custom_call.1} parent=1 // pred_fallthru
      _
    // Predicated region
    $region10: #{tpu_custom_call.1} parent=1 // pred_check
      _
    $region11: #{tpu_custom_call.1} parent=1 // pred_check_branch
      %30 = sbr.rel (0) target = $region13
    $region12: #{tpu_custom_call.1} parent=1 // pred_region
      %s32 = ssub.s32 6144, 6144
      %33 = vsyncadd [#allocation6], %s32
      %s34 = sshll.u32 [#allocation5], 4
      %s35 = int_to_ptr.vmem [resolvable:$true] %s34
      %40 = dma.hbm_to_vmem [thread:$0]  %s2, 6144, %s35, [#allocation6], 128, 128, 8
    $region13: #{tpu_custom_call.1} parent=1 // pred_fallthru
      _
    // Predicated region
    $region14: #{tpu_custom_call.1} parent=1 // pred_check
      _
    $region15: #{tpu_custom_call.1} parent=1 // pred_check_branch
      %42 = sbr.rel (0) target = $region17
    $region16: #{tpu_custom_call.1} parent=1 // pred_region
      _
    $region17: #{tpu_custom_call.1} parent=1 // pred_fallthru
      _
    // Predicated region
    $region18: #{tpu_custom_call.1} parent=1 // pred_check
      _
    $region19: #{tpu_custom_call.1} parent=1 // pred_check_branch
      %44 = sbr.rel (0) target = $region21
    $region20: #{tpu_custom_call.1} parent=1 // pred_region
      _
    $region21: #{tpu_custom_call.1} parent=1 // pred_fallthru
      _
    // Predicated region
    $region22: #{tpu_custom_call.1} parent=1 // pred_check
      _
    $region23: #{tpu_custom_call.1} parent=1 // pred_check_branch
      %46 = sbr.rel (0) target = $region25
    $region24: #{tpu_custom_call.1} parent=1 // pred_region
      _
    $region25: #{tpu_custom_call.1} parent=1 // pred_fallthru
      _
    // Predicated region
    $region26: #{tpu_custom_call.1} parent=1 // pred_check
      _
    $region27: #{tpu_custom_call.1} parent=1 // pred_check_branch
      %48 = sbr.rel (0) target = $region29
    $region28: #{tpu_custom_call.1} parent=1 // pred_region
      _
    $region29: #{tpu_custom_call.1} parent=1 // pred_fallthru
      _
    // Predicated region
    $region30: #{tpu_custom_call.1} parent=1 // pred_check
      _
    $region31: #{tpu_custom_call.1} parent=1 // pred_check_branch
      %50 = sbr.rel (0) target = $region33
    $region32: #{tpu_custom_call.1} parent=1 // pred_region
      %51 = dma.done [#allocation3], 6144
    $region33: #{tpu_custom_call.1} parent=1 // pred_fallthru
      _
    // Predicated region
    $region34: #{tpu_custom_call.1} parent=1 // pred_check
      _
    $region35: #{tpu_custom_call.1} parent=1 // pred_check_branch
      %53 = sbr.rel (0) target = $region37
    $region36: #{tpu_custom_call.1} parent=1 // pred_region
      %54 = dma.done [#allocation6], 6144
    $region37: #{tpu_custom_call.1} parent=1 // pred_fallthru
      _
    %v55 = vld [vmem:[%s0] sm:$0xff]
    %v56 = vld [vmem:[%s0 + $0x8] sm:$0xff]
    %v57 = vld [vmem:[%s5] sm:$0xff]
    %v58 = vld [vmem:[%s5 + $0x8] sm:$0xff]
    %v59 = vld [vmem:[%s5 + $0x10] sm:$0xff]
    %v60 = vld [vmem:[%s5 + $0x18] sm:$0xff]
    %v61 = vld [vmem:[%s5 + $0x20] sm:$0xff]
    %v62 = vld [vmem:[%s5 + $0x28] sm:$0xff]
    %v63 = vld [vmem:[%s5 + $0x30] sm:$0xff]
    %v64 = vld [vmem:[%s5 + $0x38] sm:$0xff]
    %v65 = vld [vmem:[%s5 + $0x40] sm:$0xff]
    %v66 = vld [vmem:[%s5 + $0x48] sm:$0xff]
    %v67 = vld [vmem:[%s5 + $0x50] sm:$0xff]
    %v68 = vld [vmem:[%s5 + $0x58] sm:$0xff]
    %v69 = vld [vmem:[%s5 + $0x60] sm:$0xff]
    %v70 = vld [vmem:[%s5 + $0x68] sm:$0xff]
    %v71 = vld [vmem:[%s5 + $0x70] sm:$0xff]
    %v72 = vld [vmem:[%s5 + $0x78] sm:$0xff]
    %v73 = vld [vmem:[%s6] sm:$0xff]
    %v74 = vlaneseq
    %v75 = vshrl.u32 %v74, 7
    %v76 = vadd.s32 %v75, 8
    %v77 = vrot.slane %v55, 7
    %v78 = vrot.slane %v56, 7
    %vm79 = vcmp.lt.s32.totalorder %v75, 1
    %v80 = vsel %vm79, %v77, %v78
    %v81 = vsel %vm79, %v78, %v77
    %vm82 = vcmp.eq.s32.totalorder %v75, 0
    %vm83 = vcmp.eq.s32.totalorder %v76, 0
    %v84 = vsel %vm82, 1, 0
    %v85 = vsel %vm83, 1, 0
    %vm86 = vcmp.eq.s32.totalorder %v84, 1
    %vm87 = vcmp.eq.s32.totalorder %v85, 1
    %v88 = vlaneseq
    %v89 = vshrl.u32 %v88, 7
    %v90 = vsub.s32 1, %v89
    %v91 = vrot.slane %v55, %v90
    %v92 = vsel %vm86, %v91, %v81
    %v93 = vsel %vm87, %v91, %v80
    %v94 = vrot.slane %v55, 1
    %v95 = vrot.slane %v56, 1
    %vm96 = vcmp.lt.s32.totalorder %v75, 7
    %v97 = vsel %vm96, %v94, %v95
    %v98 = vsel %vm96, %v95, %v94
    %vm99 = vcmp.eq.s32.totalorder %v75, 15
    %vm100 = vcmp.eq.s32.totalorder %v76, 15
    %v101 = vsel %vm99, 1, 0
    %v102 = vsel %vm100, 1, 0
    %vm103 = vcmp.eq.s32.totalorder %v101, 1
    %vm104 = vcmp.eq.s32.totalorder %v102, 1
    %v105 = vlaneseq
    %v106 = vshrl.u32 %v105, 7
    %v107 = vsub.s32 6, %v106
    %v108 = vrot.slane %v56, %v107
    %v109 = vsel %vm103, %v108, %v97
    %v110 = vsel %vm104, %v108, %v98
    %v111 = vld [vmem:[#allocation2] sm:$0xff]
    %v112 = vld [vmem:[#allocation2 + $0x8] sm:$0xff]
    %v113 = vld [vmem:[#allocation2 + $0x10] sm:$0xff]
    %v114 = vld [vmem:[#allocation2 + $0x18] sm:$0xff]
    %v115 = vld [vmem:[#allocation2 + $0x20] sm:$0xff]
    %v116 = vld [vmem:[#allocation2 + $0x28] sm:$0xff]
    %v117 = vld [vmem:[#allocation2 + $0x30] sm:$0xff]
    %v118 = vld [vmem:[#allocation2 + $0x38] sm:$0xff]
    %v119 = vld [vmem:[#allocation2 + $0x40] sm:$0xff]
    %v120 = vld [vmem:[#allocation2 + $0x48] sm:$0xff]
    %v121 = vld [vmem:[#allocation2 + $0x50] sm:$0xff]
    %v122 = vld [vmem:[#allocation2 + $0x58] sm:$0xff]
    %v123 = vld [vmem:[#allocation2 + $0x60] sm:$0xff]
    %v124 = vld [vmem:[#allocation2 + $0x68] sm:$0xff]
    %v125 = vld [vmem:[#allocation2 + $0x70] sm:$0xff]
    %v126 = vld [vmem:[#allocation2 + $0x78] sm:$0xff]
    %v127 = vld [vmem:[#allocation2 + $0x80] sm:$0xff]
    %v128 = vld [vmem:[#allocation2 + $0x88] sm:$0xff]
    %v129 = vld [vmem:[#allocation2 + $0x90] sm:$0xff]
    %v130 = vld [vmem:[#allocation2 + $0x98] sm:$0xff]
    %v131 = vld [vmem:[#allocation2 + $0xa0] sm:$0xff]
    %v132 = vld [vmem:[#allocation2 + $0xa8] sm:$0xff]
    %v133 = vld [vmem:[#allocation2 + $0xb0] sm:$0xff]
    %v134 = vld [vmem:[#allocation2 + $0xb8] sm:$0xff]
    %v135 = vld [vmem:[#allocation2 + $0xc0] sm:$0xff]
    %v136 = vld [vmem:[#allocation2 + $0xc8] sm:$0xff]
    %v137 = vld [vmem:[#allocation2 + $0xd0] sm:$0xff]
    %v138 = vld [vmem:[#allocation2 + $0xd8] sm:$0xff]
    %v139 = vld [vmem:[#allocation2 + $0xe0] sm:$0xff]
    %v140 = vld [vmem:[#allocation2 + $0xe8] sm:$0xff]
    %v141 = vld [vmem:[#allocation2 + $0xf0] sm:$0xff]
    %v142 = vld [vmem:[#allocation2 + $0xf8] sm:$0xff]
    %v143 = vld [vmem:[#allocation2 + $0x100] sm:$0xff]
    %v144 = vld [vmem:[#allocation2 + $0x108] sm:$0xff]
    %v145 = vld [vmem:[#allocation2 + $0x110] sm:$0xff]
    %v146 = vld [vmem:[#allocation2 + $0x118] sm:$0xff]
    %v147 = vld [vmem:[#allocation2 + $0x120] sm:$0xff]
    %v148 = vld [vmem:[#allocation2 + $0x128] sm:$0xff]
    %v149 = vld [vmem:[#allocation2 + $0x130] sm:$0xff]
    %v150 = vld [vmem:[#allocation2 + $0x138] sm:$0xff]
    %v151 = vld [vmem:[#allocation2 + $0x140] sm:$0xff]
    %v152 = vld [vmem:[#allocation2 + $0x148] sm:$0xff]
    %v153 = vld [vmem:[#allocation2 + $0x150] sm:$0xff]
    %v154 = vld [vmem:[#allocation2 + $0x158] sm:$0xff]
    %v155 = vld [vmem:[#allocation2 + $0x160] sm:$0xff]
    %v156 = vld [vmem:[#allocation2 + $0x168] sm:$0xff]
    %v157 = vld [vmem:[#allocation2 + $0x170] sm:$0xff]
    %v158 = vld [vmem:[#allocation2 + $0x178] sm:$0xff]
    %v159 = vld [vmem:[%s3] sm:$0x1]
    %v161 = vlaneseq
    %v162 = vshrl.u32 %v161, 7
    %v163 = vsub.s32 0, %v162
    %v164 = vrot.slane %v159, %v163
    %166 = vmatprep.subr.mxu0 0.0
    %167 = vmatpush1.msra.mxu0 %v111
    %168 = vmatprep.subr.mxu0 0.0
    %169 = vmatpush1.msra.mxu0 %v112
    %170 = vmatprep.subr.mxu0 0.0
    %171 = vmatpush1.msra.mxu0 %v113
    %172 = vmatprep.subr.mxu0 0.0
    %173 = vmatpush1.msra.mxu0 %v114
    %174 = vmatprep.subr.mxu0 0.0
    %175 = vmatpush1.msra.mxu0 %v115
    %176 = vmatprep.subr.mxu0 0.0
    %177 = vmatpush1.msra.mxu0 %v116
    %178 = vmatprep.subr.mxu0 0.0
    %179 = vmatpush1.msra.mxu0 %v117
    %180 = vmatprep.subr.mxu0 0.0
    %181 = vmatpush1.msra.mxu0 %v118
    %182 = vmatprep.subr.mxu0 0.0
    %183 = vmatpush1.msra.mxu0 %v119
    %184 = vmatprep.subr.mxu0 0.0
    %185 = vmatpush1.msra.mxu0 %v120
    %186 = vmatprep.subr.mxu0 0.0
    %187 = vmatpush1.msra.mxu0 %v121
    %188 = vmatprep.subr.mxu0 0.0
    %189 = vmatpush1.msra.mxu0 %v122
    %190 = vmatprep.subr.mxu0 0.0
    %191 = vmatpush1.msra.mxu0 %v123
    %192 = vmatprep.subr.mxu0 0.0
    %193 = vmatpush1.msra.mxu0 %v124
    %194 = vmatprep.subr.mxu0 0.0
    %195 = vmatpush1.msra.mxu0 %v125
    %196 = vmatprep.subr.mxu0 0.0
    %197 = vmatpush1.msra.mxu0 %v126
    %198 = vmatprep.subr.mxu0 0.0
    %199 = vmatpush1.msra.mxu0 %v127
    %200 = vmatprep.subr.mxu0 0.0
    %201 = vmatpush1.msra.mxu0 %v128
    %202 = vmatprep.subr.mxu0 0.0
    %203 = vmatpush1.msra.mxu0 %v129
    %204 = vmatprep.subr.mxu0 0.0
    %205 = vmatpush1.msra.mxu0 %v130
    %206 = vmatprep.subr.mxu0 0.0
    %207 = vmatpush1.msra.mxu0 %v131
    %208 = vmatprep.subr.mxu0 0.0
    %209 = vmatpush1.msra.mxu0 %v132
    %210 = vmatprep.subr.mxu0 0.0
    %211 = vmatpush1.msra.mxu0 %v133
    %212 = vmatprep.subr.mxu0 0.0
    %213 = vmatpush1.msra.mxu0 %v134
    %214 = vmatprep.subr.mxu0 0.0
    %215 = vmatpush1.msra.mxu0 %v135
    %216 = vmatprep.subr.mxu0 0.0
    %217 = vmatpush1.msra.mxu0 %v136
    %218 = vmatprep.subr.mxu0 0.0
    %219 = vmatpush1.msra.mxu0 %v137
    %220 = vmatprep.subr.mxu0 0.0
    %221 = vmatpush1.msra.mxu0 %v138
    %222 = vmatprep.subr.mxu0 0.0
    %223 = vmatpush1.msra.mxu0 %v139
    %224 = vmatprep.subr.mxu0 0.0
    %225 = vmatpush1.msra.mxu0 %v140
    %226 = vmatprep.subr.mxu0 0.0
    %227 = vmatpush1.msra.mxu0 %v141
    %228 = vmatprep.subr.mxu0 0.0
    %229 = vmatpush1.msra.mxu0 %v142
    %230 = vmatprep.mubr.f32.mxu0 %v55
    %231 = vmatmul.mubr.f32.gmra.mrb[0].mxu0 %v92
    %v232 = vpop.f32.mrb[0].mxu0
    %v233 = vadd.f32 %v164, %v232
    %v234 = vpop.f32.mrb[0].mxu0
    %235 = vmatprep.mubr.f32.mxu0 %v56
    %236 = vmatmul.mubr.f32.gmra.mrb[0].mxu0 %v93
    %v237 = vpop.f32.mrb[0].mxu0
    %v238 = vadd.f32 %v164, %v237
    %v239 = vpop.f32.mrb[0].mxu0
    %240 = vdwg.mxu0
    %241 = vmatprep.subr.mxu0 0.0
    %242 = vmatpush1.msra.mxu0 %v143
    %243 = vmatprep.subr.mxu0 0.0
    %244 = vmatpush1.msra.mxu0 %v144
    %245 = vmatprep.subr.mxu0 0.0
    %246 = vmatpush1.msra.mxu0 %v145
    %247 = vmatprep.subr.mxu0 0.0
    %248 = vmatpush1.msra.mxu0 %v146
    %249 = vmatprep.subr.mxu0 0.0
    %250 = vmatpush1.msra.mxu0 %v147
    %251 = vmatprep.subr.mxu0 0.0
    %252 = vmatpush1.msra.mxu0 %v148
    %253 = vmatprep.subr.mxu0 0.0
    %254 = vmatpush1.msra.mxu0 %v149
    %255 = vmatprep.subr.mxu0 0.0
    %256 = vmatpush1.msra.mxu0 %v150
    %257 = vmatprep.subr.mxu0 0.0
    %258 = vmatpush1.msra.mxu0 %v151
    %259 = vmatprep.subr.mxu0 0.0
    %260 = vmatpush1.msra.mxu0 %v152
    %261 = vmatprep.subr.mxu0 0.0
    %262 = vmatpush1.msra.mxu0 %v153
    %263 = vmatprep.subr.mxu0 0.0
    %264 = vmatpush1.msra.mxu0 %v154
    %265 = vmatprep.subr.mxu0 0.0
    %266 = vmatpush1.msra.mxu0 %v155
    %267 = vmatprep.subr.mxu0 0.0
    %268 = vmatpush1.msra.mxu0 %v156
    %269 = vmatprep.subr.mxu0 0.0
    %270 = vmatpush1.msra.mxu0 %v157
    %271 = vmatprep.subr.mxu0 0.0
    %272 = vmatpush1.msra.mxu0 %v158
    %273 = vmatprep.subr.mxu0 0.0
    %274 = vmatpush1.msra.mxu0 0.0
    %275 = vmatprep.subr.mxu0 0.0
    %276 = vmatpush1.msra.mxu0 0.0
    %277 = vmatprep.subr.mxu0 0.0
    %278 = vmatpush1.msra.mxu0 0.0
    %279 = vmatprep.subr.mxu0 0.0
    %280 = vmatpush1.msra.mxu0 0.0
    %281 = vmatprep.subr.mxu0 0.0
    %282 = vmatpush1.msra.mxu0 0.0
    %283 = vmatprep.subr.mxu0 0.0
    %284 = vmatpush1.msra.mxu0 0.0
    %285 = vmatprep.subr.mxu0 0.0
    %286 = vmatpush1.msra.mxu0 0.0
    %287 = vmatprep.subr.mxu0 0.0
    %288 = vmatpush1.msra.mxu0 0.0
    %289 = vmatprep.subr.mxu0 0.0
    %290 = vmatpush1.msra.mxu0 0.0
    %291 = vmatprep.subr.mxu0 0.0
    %292 = vmatpush1.msra.mxu0 0.0
    %293 = vmatprep.subr.mxu0 0.0
    %294 = vmatpush1.msra.mxu0 0.0
    %295 = vmatprep.subr.mxu0 0.0
    %296 = vmatpush1.msra.mxu0 0.0
    %297 = vmatprep.subr.mxu0 0.0
    %298 = vmatpush1.msra.mxu0 0.0
    %299 = vmatprep.subr.mxu0 0.0
    %300 = vmatpush1.msra.mxu0 0.0
    %301 = vmatprep.subr.mxu0 0.0
    %302 = vmatpush1.msra.mxu0 0.0
    %303 = vmatprep.subr.mxu0 0.0
    %304 = vmatpush1.msra.mxu0 0.0
    %305 = vmatprep.mubr.f32.mxu0 0.0
    %306 = vmatmul.mubr.f32.gmra.mrb[0].mxu0 %v109
    %v307 = vpop.f32.mrb[0].mxu0
    %v308 = vadd.f32 %v233, %v307
    %v309 = vpop.f32.mrb[0].mxu0
    %310 = vmatprep.mubr.f32.mxu0 0.0
    %311 = vmatmul.mubr.f32.gmra.mrb[0].mxu0 %v110
    %v312 = vpop.f32.mrb[0].mxu0
    %v313 = vadd.f32 %v238, %v312
    %v314 = vpop.f32.mrb[0].mxu0
    %315 = vdwg.mxu0
    %v316 = vadd.f32 %v308, %v313
    %v317 = vrot.slane %v316, 4
    %v318 = vadd.f32 %v316, %v317
    %v319 = vrot.slane %v318, 2
    %v320 = vadd.f32 %v318, %v319
    %v321 = vrot.slane %v320, 1
    %v322 = vadd.f32 %v320, %v321
    %v323 = vmul.f32 %v308, %v308
    %v324 = vmul.f32 %v313, %v313
    %v325 = vadd.f32 %v323, %v324
    %v326 = vrot.slane %v325, 4
    %v327 = vadd.f32 %v325, %v326
    %v328 = vrot.slane %v327, 2
    %v329 = vadd.f32 %v327, %v328
    %v330 = vrot.slane %v329, 1
    %v331 = vadd.f32 %v329, %v330
    %vm332 = vcmask 1040384
    %v333 = vsel %vm332, %v322, %v331
    %334 = vmatprep.subr.mxu0 0.0
    %335 = vmatpush1.msra.mxu0 %v57
    %336 = vmatprep.subr.mxu0 0.0
    %337 = vmatpush1.msra.mxu0 %v58
    %338 = vmatprep.subr.mxu0 0.0
    %339 = vmatpush1.msra.mxu0 %v59
    %340 = vmatprep.subr.mxu0 0.0
    %341 = vmatpush1.msra.mxu0 %v60
    %342 = vmatprep.subr.mxu0 0.0
    %343 = vmatpush1.msra.mxu0 %v61
    %344 = vmatprep.subr.mxu0 0.0
    %345 = vmatpush1.msra.mxu0 %v62
    %346 = vmatprep.subr.mxu0 0.0
    %347 = vmatpush1.msra.mxu0 %v63
    %348 = vmatprep.subr.mxu0 0.0
    %349 = vmatpush1.msra.mxu0 %v64
    %350 = vmatprep.subr.mxu0 0.0
    %351 = vmatpush1.msra.mxu0 %v65
    %352 = vmatprep.subr.mxu0 0.0
    %353 = vmatpush1.msra.mxu0 %v66
    %354 = vmatprep.subr.mxu0 0.0
    %355 = vmatpush1.msra.mxu0 %v67
    %356 = vmatprep.subr.mxu0 0.0
    %357 = vmatpush1.msra.mxu0 %v68
    %358 = vmatprep.subr.mxu0 0.0
    %359 = vmatpush1.msra.mxu0 %v69
    %360 = vmatprep.subr.mxu0 0.0
    %361 = vmatpush1.msra.mxu0 %v70
    %362 = vmatprep.subr.mxu0 0.0
    %363 = vmatpush1.msra.mxu0 %v71
    %364 = vmatprep.subr.mxu0 0.0
    %365 = vmatpush1.msra.mxu0 %v72
    %366 = vmatprep.subr.mxu0 0.0
    %367 = vmatpush1.msra.mxu0 0.0
    %368 = vmatprep.subr.mxu0 0.0
    %369 = vmatpush1.msra.mxu0 0.0
    %370 = vmatprep.subr.mxu0 0.0
    %371 = vmatpush1.msra.mxu0 0.0
    %372 = vmatprep.subr.mxu0 0.0
    %373 = vmatpush1.msra.mxu0 0.0
    %374 = vmatprep.subr.mxu0 0.0
    %375 = vmatpush1.msra.mxu0 0.0
    %376 = vmatprep.subr.mxu0 0.0
    %377 = vmatpush1.msra.mxu0 0.0
    %378 = vmatprep.subr.mxu0 0.0
    %379 = vmatpush1.msra.mxu0 0.0
    %380 = vmatprep.subr.mxu0 0.0
    %381 = vmatpush1.msra.mxu0 0.0
    %382 = vmatprep.subr.mxu0 0.0
    %383 = vmatpush1.msra.mxu0 0.0
    %384 = vmatprep.subr.mxu0 0.0
    %385 = vmatpush1.msra.mxu0 0.0
    %386 = vmatprep.subr.mxu0 0.0
    %387 = vmatpush1.msra.mxu0 0.0
    %388 = vmatprep.subr.mxu0 0.0
    %389 = vmatpush1.msra.mxu0 0.0
    %390 = vmatprep.subr.mxu0 0.0
    %391 = vmatpush1.msra.mxu0 0.0
    %392 = vmatprep.subr.mxu0 0.0
    %393 = vmatpush1.msra.mxu0 0.0
    %394 = vmatprep.subr.mxu0 0.0
    %395 = vmatpush1.msra.mxu0 0.0
    %396 = vmatprep.subr.mxu0 0.0
    %397 = vmatpush1.msra.mxu0 0.0
    %398 = vmatprep.mubr.f32.mxu0 0.0
    %399 = vmatmul.mubr.f32.gmra.mrb[0].mxu0 %v333
    %v400 = vpop.f32.mrb[0].mxu0
    %v401 = vadd.f32 0.0, %v400
    %v402 = vpop.f32.mrb[0].mxu0
    %403 = vdwg.mxu0
    %v404 = vmul.f32 %v401, 0.00390625
    %v405 = vmul.f32 %v404, %v404
    %v407 = vrot.slane %v405, 7
    %v409 = vsub.f32 %v404, %v407
    %v410 = vadd.f32 %v409, 1e-05
    %v411 = vrsqrt.pop %v410
    %v412 = vsub.f32 0.0, %v404
    %v414 = vrot.slane %v411, 1
    %v416 = vmul.f32 %v412, %v414
    %v418 = vrot.slane %v416, 7
    %v420 = vsel %vm332, %v414, %v418
    %vm421 = vcmask 64512
    %v423 = vsel %vm421, %v420, 0
    %425 = vmatprep.subr.mxu0 0.0
    %426 = vmatpush1.msra.mxu0 %v73
    %427 = vmatprep.subr.mxu0 0.0
    %428 = vmatpush1.msra.mxu0 0.0
    %429 = vmatprep.subr.mxu0 0.0
    %430 = vmatpush1.msra.mxu0 0.0
    %431 = vmatprep.subr.mxu0 0.0
    %432 = vmatpush1.msra.mxu0 0.0
    %433 = vmatprep.subr.mxu0 0.0
    %434 = vmatpush1.msra.mxu0 0.0
    %435 = vmatprep.subr.mxu0 0.0
    %436 = vmatpush1.msra.mxu0 0.0
    %437 = vmatprep.subr.mxu0 0.0
    %438 = vmatpush1.msra.mxu0 0.0
    %439 = vmatprep.subr.mxu0 0.0
    %440 = vmatpush1.msra.mxu0 0.0
    %441 = vmatprep.subr.mxu0 0.0
    %442 = vmatpush1.msra.mxu0 0.0
    %443 = vmatprep.subr.mxu0 0.0
    %444 = vmatpush1.msra.mxu0 0.0
    %445 = vmatprep.subr.mxu0 0.0
    %446 = vmatpush1.msra.mxu0 0.0
    %447 = vmatprep.subr.mxu0 0.0
    %448 = vmatpush1.msra.mxu0 0.0
    %449 = vmatprep.subr.mxu0 0.0
    %450 = vmatpush1.msra.mxu0 0.0
    %451 = vmatprep.subr.mxu0 0.0
    %452 = vmatpush1.msra.mxu0 0.0
    %453 = vmatprep.subr.mxu0 0.0
    %454 = vmatpush1.msra.mxu0 0.0
    %455 = vmatprep.subr.mxu0 0.0
    %456 = vmatpush1.msra.mxu0 0.0
    %457 = vmatprep.subr.mxu0 0.0
    %458 = vmatpush1.msra.mxu0 0.0
    %459 = vmatprep.subr.mxu0 0.0
    %460 = vmatpush1.msra.mxu0 0.0
    %461 = vmatprep.subr.mxu0 0.0
    %462 = vmatpush1.msra.mxu0 0.0
    %463 = vmatprep.subr.mxu0 0.0
    %464 = vmatpush1.msra.mxu0 0.0
    %465 = vmatprep.subr.mxu0 0.0
    %466 = vmatpush1.msra.mxu0 0.0
    %467 = vmatprep.subr.mxu0 0.0
    %468 = vmatpush1.msra.mxu0 0.0
    %469 = vmatprep.subr.mxu0 0.0
    %470 = vmatpush1.msra.mxu0 0.0
    %471 = vmatprep.subr.mxu0 0.0
    %472 = vmatpush1.msra.mxu0 0.0
    %473 = vmatprep.subr.mxu0 0.0
    %474 = vmatpush1.msra.mxu0 0.0
    %475 = vmatprep.subr.mxu0 0.0
    %476 = vmatpush1.msra.mxu0 0.0
    %477 = vmatprep.subr.mxu0 0.0
    %478 = vmatpush1.msra.mxu0 0.0
    %479 = vmatprep.subr.mxu0 0.0
    %480 = vmatpush1.msra.mxu0 0.0
    %481 = vmatprep.subr.mxu0 0.0
    %482 = vmatpush1.msra.mxu0 0.0
    %483 = vmatprep.subr.mxu0 0.0
    %484 = vmatpush1.msra.mxu0 0.0
    %485 = vmatprep.subr.mxu0 0.0
    %486 = vmatpush1.msra.mxu0 0.0
    %487 = vmatprep.subr.mxu0 0.0
    %488 = vmatpush1.msra.mxu0 0.0
    %489 = vmatprep.mubr.f32.mxu0 0.0
    %490 = vmatmul.mubr.f32.gmra.mrb[0].mxu0 %v423
    %v491 = vpop.f32.mrb[0].mxu0
    %v492 = vadd.f32 0.0, %v491
    %v493 = vpop.f32.mrb[0].mxu0
    %494 = vdwg.mxu0
    %v495 = vlaneseq
    %v496 = vshrl.u32 %v495, 7
    %v497 = vsub.s32 0, %v496
    %v498 = vrot.slane %v492, %v497
    %v499 = vmul.f32 %v308, %v498
    %v500 = vmul.f32 %v313, %v498
    %v501 = vlaneseq
    %v502 = vshrl.u32 %v501, 7
    %v503 = vsub.s32 1, %v502
    %v504 = vrot.slane %v492, %v503
    %v505 = vadd.f32 %v499, %v504
    %v506 = vadd.f32 %v500, %v504
    %v507 = vmax.f32 %v505, 0.0
    %v508 = vmax.f32 %v506, 0.0
    %v509 = vrot.slane %v507, 7
    %v510 = vrot.slane %v508, 7
    %v511 = vsel %vm79, %v509, %v510
    %v512 = vsel %vm79, %v510, %v509
    %v513 = vlaneseq
    %v514 = vshrl.u32 %v513, 7
    %v515 = vsub.s32 1, %v514
    %v516 = vrot.slane %v507, %v515
    %v517 = vsel %vm86, %v516, %v512
    %v518 = vsel %vm87, %v516, %v511
    %v519 = vrot.slane %v507, 1
    %v520 = vrot.slane %v508, 1
    %v521 = vsel %vm96, %v519, %v520
    %v522 = vsel %vm96, %v520, %v519
    %v523 = vlaneseq
    %v524 = vshrl.u32 %v523, 7
    %v525 = vsub.s32 6, %v524
    %v526 = vrot.slane %v508, %v525
    %v527 = vsel %vm103, %v526, %v521
    %v528 = vsel %vm104, %v526, %v522
    %v529 = vld [vmem:[#allocation5] sm:$0xff]
    %v530 = vld [vmem:[#allocation5 + $0x8] sm:$0xff]
    %v531 = vld [vmem:[#allocation5 + $0x10] sm:$0xff]
    %v532 = vld [vmem:[#allocation5 + $0x18] sm:$0xff]
    %v533 = vld [vmem:[#allocation5 + $0x20] sm:$0xff]
    %v534 = vld [vmem:[#allocation5 + $0x28] sm:$0xff]
    %v535 = vld [vmem:[#allocation5 + $0x30] sm:$0xff]
    %v536 = vld [vmem:[#allocation5 + $0x38] sm:$0xff]
    %v537 = vld [vmem:[#allocation5 + $0x40] sm:$0xff]
    %v538 = vld [vmem:[#allocation5 + $0x48] sm:$0xff]
    %v539 = vld [vmem:[#allocation5 + $0x50] sm:$0xff]
    %v540 = vld [vmem:[#allocation5 + $0x58] sm:$0xff]
    %v541 = vld [vmem:[#allocation5 + $0x60] sm:$0xff]
    %v542 = vld [vmem:[#allocation5 + $0x68] sm:$0xff]
    %v543 = vld [vmem:[#allocation5 + $0x70] sm:$0xff]
    %v544 = vld [vmem:[#allocation5 + $0x78] sm:$0xff]
    %v545 = vld [vmem:[#allocation5 + $0x80] sm:$0xff]
    %v546 = vld [vmem:[#allocation5 + $0x88] sm:$0xff]
    %v547 = vld [vmem:[#allocation5 + $0x90] sm:$0xff]
    %v548 = vld [vmem:[#allocation5 + $0x98] sm:$0xff]
    %v549 = vld [vmem:[#allocation5 + $0xa0] sm:$0xff]
    %v550 = vld [vmem:[#allocation5 + $0xa8] sm:$0xff]
    %v551 = vld [vmem:[#allocation5 + $0xb0] sm:$0xff]
    %v552 = vld [vmem:[#allocation5 + $0xb8] sm:$0xff]
    %v553 = vld [vmem:[#allocation5 + $0xc0] sm:$0xff]
    %v554 = vld [vmem:[#allocation5 + $0xc8] sm:$0xff]
    %v555 = vld [vmem:[#allocation5 + $0xd0] sm:$0xff]
    %v556 = vld [vmem:[#allocation5 + $0xd8] sm:$0xff]
    %v557 = vld [vmem:[#allocation5 + $0xe0] sm:$0xff]
    %v558 = vld [vmem:[#allocation5 + $0xe8] sm:$0xff]
    %v559 = vld [vmem:[#allocation5 + $0xf0] sm:$0xff]
    %v560 = vld [vmem:[#allocation5 + $0xf8] sm:$0xff]
    %v561 = vld [vmem:[#allocation5 + $0x100] sm:$0xff]
    %v562 = vld [vmem:[#allocation5 + $0x108] sm:$0xff]
    %v563 = vld [vmem:[#allocation5 + $0x110] sm:$0xff]
    %v564 = vld [vmem:[#allocation5 + $0x118] sm:$0xff]
    %v565 = vld [vmem:[#allocation5 + $0x120] sm:$0xff]
    %v566 = vld [vmem:[#allocation5 + $0x128] sm:$0xff]
    %v567 = vld [vmem:[#allocation5 + $0x130] sm:$0xff]
    %v568 = vld [vmem:[#allocation5 + $0x138] sm:$0xff]
    %v569 = vld [vmem:[#allocation5 + $0x140] sm:$0xff]
    %v570 = vld [vmem:[#allocation5 + $0x148] sm:$0xff]
    %v571 = vld [vmem:[#allocation5 + $0x150] sm:$0xff]
    %v572 = vld [vmem:[#allocation5 + $0x158] sm:$0xff]
    %v573 = vld [vmem:[#allocation5 + $0x160] sm:$0xff]
    %v574 = vld [vmem:[#allocation5 + $0x168] sm:$0xff]
    %v575 = vld [vmem:[#allocation5 + $0x170] sm:$0xff]
    %v576 = vld [vmem:[#allocation5 + $0x178] sm:$0xff]
    %v577 = vld [vmem:[%s4] sm:$0x1]
    %v579 = vlaneseq
    %v580 = vshrl.u32 %v579, 7
    %v581 = vsub.s32 0, %v580
    %v582 = vrot.slane %v577, %v581
    %584 = vmatprep.subr.mxu0 0.0
    %585 = vmatpush1.msra.mxu0 %v529
    %586 = vmatprep.subr.mxu0 0.0
    %587 = vmatpush1.msra.mxu0 %v530
    %588 = vmatprep.subr.mxu0 0.0
    %589 = vmatpush1.msra.mxu0 %v531
    %590 = vmatprep.subr.mxu0 0.0
    %591 = vmatpush1.msra.mxu0 %v532
    %592 = vmatprep.subr.mxu0 0.0
    %593 = vmatpush1.msra.mxu0 %v533
    %594 = vmatprep.subr.mxu0 0.0
    %595 = vmatpush1.msra.mxu0 %v534
    %596 = vmatprep.subr.mxu0 0.0
    %597 = vmatpush1.msra.mxu0 %v535
    %598 = vmatprep.subr.mxu0 0.0
    %599 = vmatpush1.msra.mxu0 %v536
    %600 = vmatprep.subr.mxu0 0.0
    %601 = vmatpush1.msra.mxu0 %v537
    %602 = vmatprep.subr.mxu0 0.0
    %603 = vmatpush1.msra.mxu0 %v538
    %604 = vmatprep.subr.mxu0 0.0
    %605 = vmatpush1.msra.mxu0 %v539
    %606 = vmatprep.subr.mxu0 0.0
    %607 = vmatpush1.msra.mxu0 %v540
    %608 = vmatprep.subr.mxu0 0.0
    %609 = vmatpush1.msra.mxu0 %v541
    %610 = vmatprep.subr.mxu0 0.0
    %611 = vmatpush1.msra.mxu0 %v542
    %612 = vmatprep.subr.mxu0 0.0
    %613 = vmatpush1.msra.mxu0 %v543
    %614 = vmatprep.subr.mxu0 0.0
    %615 = vmatpush1.msra.mxu0 %v544
    %616 = vmatprep.subr.mxu0 0.0
    %617 = vmatpush1.msra.mxu0 %v545
    %618 = vmatprep.subr.mxu0 0.0
    %619 = vmatpush1.msra.mxu0 %v546
    %620 = vmatprep.subr.mxu0 0.0
    %621 = vmatpush1.msra.mxu0 %v547
    %622 = vmatprep.subr.mxu0 0.0
    %623 = vmatpush1.msra.mxu0 %v548
    %624 = vmatprep.subr.mxu0 0.0
    %625 = vmatpush1.msra.mxu0 %v549
    %626 = vmatprep.subr.mxu0 0.0
    %627 = vmatpush1.msra.mxu0 %v550
    %628 = vmatprep.subr.mxu0 0.0
    %629 = vmatpush1.msra.mxu0 %v551
    %630 = vmatprep.subr.mxu0 0.0
    %631 = vmatpush1.msra.mxu0 %v552
    %632 = vmatprep.subr.mxu0 0.0
    %633 = vmatpush1.msra.mxu0 %v553
    %634 = vmatprep.subr.mxu0 0.0
    %635 = vmatpush1.msra.mxu0 %v554
    %636 = vmatprep.subr.mxu0 0.0
    %637 = vmatpush1.msra.mxu0 %v555
    %638 = vmatprep.subr.mxu0 0.0
    %639 = vmatpush1.msra.mxu0 %v556
    %640 = vmatprep.subr.mxu0 0.0
    %641 = vmatpush1.msra.mxu0 %v557
    %642 = vmatprep.subr.mxu0 0.0
    %643 = vmatpush1.msra.mxu0 %v558
    %644 = vmatprep.subr.mxu0 0.0
    %645 = vmatpush1.msra.mxu0 %v559
    %646 = vmatprep.subr.mxu0 0.0
    %647 = vmatpush1.msra.mxu0 %v560
    %648 = vmatprep.mubr.f32.mxu0 %v507
    %649 = vmatmul.mubr.f32.gmra.mrb[0].mxu0 %v517
    %v650 = vpop.f32.mrb[0].mxu0
    %v651 = vadd.f32 %v582, %v650
    %v652 = vpop.f32.mrb[0].mxu0
    %653 = vmatprep.mubr.f32.mxu0 %v508
    %654 = vmatmul.mubr.f32.gmra.mrb[0].mxu0 %v518
    %v655 = vpop.f32.mrb[0].mxu0
    %v656 = vadd.f32 %v582, %v655
    %v657 = vpop.f32.mrb[0].mxu0
    %658 = vdwg.mxu0
    %659 = vmatprep.subr.mxu0 0.0
    %660 = vmatpush1.msra.mxu0 %v561
    %661 = vmatprep.subr.mxu0 0.0
    %662 = vmatpush1.msra.mxu0 %v562
    %663 = vmatprep.subr.mxu0 0.0
    %664 = vmatpush1.msra.mxu0 %v563
    %665 = vmatprep.subr.mxu0 0.0
    %666 = vmatpush1.msra.mxu0 %v564
    %667 = vmatprep.subr.mxu0 0.0
    %668 = vmatpush1.msra.mxu0 %v565
    %669 = vmatprep.subr.mxu0 0.0
    %670 = vmatpush1.msra.mxu0 %v566
    %671 = vmatprep.subr.mxu0 0.0
    %672 = vmatpush1.msra.mxu0 %v567
    %673 = vmatprep.subr.mxu0 0.0
    %674 = vmatpush1.msra.mxu0 %v568
    %675 = vmatprep.subr.mxu0 0.0
    %676 = vmatpush1.msra.mxu0 %v569
    %677 = vmatprep.subr.mxu0 0.0
    %678 = vmatpush1.msra.mxu0 %v570
    %679 = vmatprep.subr.mxu0 0.0
    %680 = vmatpush1.msra.mxu0 %v571
    %681 = vmatprep.subr.mxu0 0.0
    %682 = vmatpush1.msra.mxu0 %v572
    %683 = vmatprep.subr.mxu0 0.0
    %684 = vmatpush1.msra.mxu0 %v573
    %685 = vmatprep.subr.mxu0 0.0
    %686 = vmatpush1.msra.mxu0 %v574
    %687 = vmatprep.subr.mxu0 0.0
    %688 = vmatpush1.msra.mxu0 %v575
    %689 = vmatprep.subr.mxu0 0.0
    %690 = vmatpush1.msra.mxu0 %v576
    %691 = vmatprep.subr.mxu0 0.0
    %692 = vmatpush1.msra.mxu0 0.0
    %693 = vmatprep.subr.mxu0 0.0
    %694 = vmatpush1.msra.mxu0 0.0
    %695 = vmatprep.subr.mxu0 0.0
    %696 = vmatpush1.msra.mxu0 0.0
    %697 = vmatprep.subr.mxu0 0.0
    %698 = vmatpush1.msra.mxu0 0.0
    %699 = vmatprep.subr.mxu0 0.0
    %700 = vmatpush1.msra.mxu0 0.0
    %701 = vmatprep.subr.mxu0 0.0
    %702 = vmatpush1.msra.mxu0 0.0
    %703 = vmatprep.subr.mxu0 0.0
    %704 = vmatpush1.msra.mxu0 0.0
    %705 = vmatprep.subr.mxu0 0.0
    %706 = vmatpush1.msra.mxu0 0.0
    %707 = vmatprep.subr.mxu0 0.0
    %708 = vmatpush1.msra.mxu0 0.0
    %709 = vmatprep.subr.mxu0 0.0
    %710 = vmatpush1.msra.mxu0 0.0
    %711 = vmatprep.subr.mxu0 0.0
    %712 = vmatpush1.msra.mxu0 0.0
    %713 = vmatprep.subr.mxu0 0.0
    %714 = vmatpush1.msra.mxu0 0.0
    %715 = vmatprep.subr.mxu0 0.0
    %716 = vmatpush1.msra.mxu0 0.0
    %717 = vmatprep.subr.mxu0 0.0
    %718 = vmatpush1.msra.mxu0 0.0
    %719 = vmatprep.subr.mxu0 0.0
    %720 = vmatpush1.msra.mxu0 0.0
    %721 = vmatprep.subr.mxu0 0.0
    %722 = vmatpush1.msra.mxu0 0.0
    %723 = vmatprep.mubr.f32.mxu0 0.0
    %724 = vmatmul.mubr.f32.gmra.mrb[0].mxu0 %v527
    %v725 = vpop.f32.mrb[0].mxu0
    %v726 = vadd.f32 %v651, %v725
    %v727 = vpop.f32.mrb[0].mxu0
    %728 = vmatprep.mubr.f32.mxu0 0.0
    %729 = vmatmul.mubr.f32.gmra.mrb[0].mxu0 %v528
    %v730 = vpop.f32.mrb[0].mxu0
    %v731 = vadd.f32 %v656, %v730
    %v732 = vpop.f32.mrb[0].mxu0
    %733 = vdwg.mxu0
    %v734 = vadd.f32 %v726, %v731
    %v735 = vrot.slane %v734, 4
    %v736 = vadd.f32 %v734, %v735
    %v737 = vrot.slane %v736, 2
    %v738 = vadd.f32 %v736, %v737
    %v739 = vrot.slane %v738, 1
    %v740 = vadd.f32 %v738, %v739
    %v741 = vmul.f32 %v726, %v726
    %v742 = vmul.f32 %v731, %v731
    %v743 = vadd.f32 %v741, %v742
    %v744 = vrot.slane %v743, 4
    %v745 = vadd.f32 %v743, %v744
    %v746 = vrot.slane %v745, 2
    %v747 = vadd.f32 %v745, %v746
    %v748 = vrot.slane %v747, 1
    %v749 = vadd.f32 %v747, %v748
    %v750 = vsel %vm332, %v740, %v749
    %751 = vmatprep.subr.mxu0 0.0
    %752 = vmatpush1.msra.mxu0 %v57
    %753 = vmatprep.subr.mxu0 0.0
    %754 = vmatpush1.msra.mxu0 %v58
    %755 = vmatprep.subr.mxu0 0.0
    %756 = vmatpush1.msra.mxu0 %v59
    %757 = vmatprep.subr.mxu0 0.0
    %758 = vmatpush1.msra.mxu0 %v60
    %759 = vmatprep.subr.mxu0 0.0
    %760 = vmatpush1.msra.mxu0 %v61
    %761 = vmatprep.subr.mxu0 0.0
    %762 = vmatpush1.msra.mxu0 %v62
    %763 = vmatprep.subr.mxu0 0.0
    %764 = vmatpush1.msra.mxu0 %v63
    %765 = vmatprep.subr.mxu0 0.0
    %766 = vmatpush1.msra.mxu0 %v64
    %767 = vmatprep.subr.mxu0 0.0
    %768 = vmatpush1.msra.mxu0 %v65
    %769 = vmatprep.subr.mxu0 0.0
    %770 = vmatpush1.msra.mxu0 %v66
    %771 = vmatprep.subr.mxu0 0.0
    %772 = vmatpush1.msra.mxu0 %v67
    %773 = vmatprep.subr.mxu0 0.0
    %774 = vmatpush1.msra.mxu0 %v68
    %775 = vmatprep.subr.mxu0 0.0
    %776 = vmatpush1.msra.mxu0 %v69
    %777 = vmatprep.subr.mxu0 0.0
    %778 = vmatpush1.msra.mxu0 %v70
    %779 = vmatprep.subr.mxu0 0.0
    %780 = vmatpush1.msra.mxu0 %v71
    %781 = vmatprep.subr.mxu0 0.0
    %782 = vmatpush1.msra.mxu0 %v72
    %783 = vmatprep.subr.mxu0 0.0
    %784 = vmatpush1.msra.mxu0 0.0
    %785 = vmatprep.subr.mxu0 0.0
    %786 = vmatpush1.msra.mxu0 0.0
    %787 = vmatprep.subr.mxu0 0.0
    %788 = vmatpush1.msra.mxu0 0.0
    %789 = vmatprep.subr.mxu0 0.0
    %790 = vmatpush1.msra.mxu0 0.0
    %791 = vmatprep.subr.mxu0 0.0
    %792 = vmatpush1.msra.mxu0 0.0
    %793 = vmatprep.subr.mxu0 0.0
    %794 = vmatpush1.msra.mxu0 0.0
    %795 = vmatprep.subr.mxu0 0.0
    %796 = vmatpush1.msra.mxu0 0.0
    %797 = vmatprep.subr.mxu0 0.0
    %798 = vmatpush1.msra.mxu0 0.0
    %799 = vmatprep.subr.mxu0 0.0
    %800 = vmatpush1.msra.mxu0 0.0
    %801 = vmatprep.subr.mxu0 0.0
    %802 = vmatpush1.msra.mxu0 0.0
    %803 = vmatprep.subr.mxu0 0.0
    %804 = vmatpush1.msra.mxu0 0.0
    %805 = vmatprep.subr.mxu0 0.0
    %806 = vmatpush1.msra.mxu0 0.0
    %807 = vmatprep.subr.mxu0 0.0
    %808 = vmatpush1.msra.mxu0 0.0
    %809 = vmatprep.subr.mxu0 0.0
    %810 = vmatpush1.msra.mxu0 0.0
    %811 = vmatprep.subr.mxu0 0.0
    %812 = vmatpush1.msra.mxu0 0.0
    %813 = vmatprep.subr.mxu0 0.0
    %814 = vmatpush1.msra.mxu0 0.0
    %815 = vmatprep.mubr.f32.mxu0 0.0
    %816 = vmatmul.mubr.f32.gmra.mrb[0].mxu0 %v750
    %v817 = vpop.f32.mrb[0].mxu0
    %v818 = vadd.f32 0.0, %v817
    %v819 = vpop.f32.mrb[0].mxu0
    %820 = vdwg.mxu0
    %v821 = vmul.f32 %v818, 0.00390625
    %v822 = vmul.f32 %v821, %v821
    %v824 = vrot.slane %v822, 7
    %v826 = vsub.f32 %v821, %v824
    %v827 = vadd.f32 %v826, 1e-05
    %v828 = vrsqrt.pop %v827
    %v829 = vsub.f32 0.0, %v821
    %v831 = vrot.slane %v828, 1
    %v833 = vmul.f32 %v829, %v831
    %v835 = vrot.slane %v833, 7
    %v837 = vsel %vm332, %v831, %v835
    %v839 = vsel %vm421, %v837, 0
    %841 = vmatprep.subr.mxu0 0.0
    %842 = vmatpush1.msra.mxu0 %v73
    %843 = vmatprep.subr.mxu0 0.0
    %844 = vmatpush1.msra.mxu0 0.0
    %845 = vmatprep.subr.mxu0 0.0
    %846 = vmatpush1.msra.mxu0 0.0
    %847 = vmatprep.subr.mxu0 0.0
    %848 = vmatpush1.msra.mxu0 0.0
    %849 = vmatprep.subr.mxu0 0.0
    %850 = vmatpush1.msra.mxu0 0.0
    %851 = vmatprep.subr.mxu0 0.0
    %852 = vmatpush1.msra.mxu0 0.0
    %853 = vmatprep.subr.mxu0 0.0
    %854 = vmatpush1.msra.mxu0 0.0
    %855 = vmatprep.subr.mxu0 0.0
    %856 = vmatpush1.msra.mxu0 0.0
    %857 = vmatprep.subr.mxu0 0.0
    %858 = vmatpush1.msra.mxu0 0.0
    %859 = vmatprep.subr.mxu0 0.0
    %860 = vmatpush1.msra.mxu0 0.0
    %861 = vmatprep.subr.mxu0 0.0
    %862 = vmatpush1.msra.mxu0 0.0
    %863 = vmatprep.subr.mxu0 0.0
    %864 = vmatpush1.msra.mxu0 0.0
    %865 = vmatprep.subr.mxu0 0.0
    %866 = vmatpush1.msra.mxu0 0.0
    %867 = vmatprep.subr.mxu0 0.0
    %868 = vmatpush1.msra.mxu0 0.0
    %869 = vmatprep.subr.mxu0 0.0
    %870 = vmatpush1.msra.mxu0 0.0
    %871 = vmatprep.subr.mxu0 0.0
    %872 = vmatpush1.msra.mxu0 0.0
    %873 = vmatprep.subr.mxu0 0.0
    %874 = vmatpush1.msra.mxu0 0.0
    %875 = vmatprep.subr.mxu0 0.0
    %876 = vmatpush1.msra.mxu0 0.0
    %877 = vmatprep.subr.mxu0 0.0
    %878 = vmatpush1.msra.mxu0 0.0
    %879 = vmatprep.subr.mxu0 0.0
    %880 = vmatpush1.msra.mxu0 0.0
    %881 = vmatprep.subr.mxu0 0.0
    %882 = vmatpush1.msra.mxu0 0.0
    %883 = vmatprep.subr.mxu0 0.0
    %884 = vmatpush1.msra.mxu0 0.0
    %885 = vmatprep.subr.mxu0 0.0
    %886 = vmatpush1.msra.mxu0 0.0
    %887 = vmatprep.subr.mxu0 0.0
    %888 = vmatpush1.msra.mxu0 0.0
    %889 = vmatprep.subr.mxu0 0.0
    %890 = vmatpush1.msra.mxu0 0.0
    %891 = vmatprep.subr.mxu0 0.0
    %892 = vmatpush1.msra.mxu0 0.0
    %893 = vmatprep.subr.mxu0 0.0
    %894 = vmatpush1.msra.mxu0 0.0
    %895 = vmatprep.subr.mxu0 0.0
    %896 = vmatpush1.msra.mxu0 0.0
    %897 = vmatprep.subr.mxu0 0.0
    %898 = vmatpush1.msra.mxu0 0.0
    %899 = vmatprep.subr.mxu0 0.0
    %900 = vmatpush1.msra.mxu0 0.0
    %901 = vmatprep.subr.mxu0 0.0
    %902 = vmatpush1.msra.mxu0 0.0
    %903 = vmatprep.subr.mxu0 0.0
    %904 = vmatpush1.msra.mxu0 0.0
    %905 = vmatprep.mubr.f32.mxu0 0.0
    %906 = vmatmul.mubr.f32.gmra.mrb[0].mxu0 %v839
    %v907 = vpop.f32.mrb[0].mxu0
    %v908 = vadd.f32 0.0, %v907
    %v909 = vpop.f32.mrb[0].mxu0
    %910 = vdwg.mxu0
    %v911 = vlaneseq
    %v912 = vshrl.u32 %v911, 7
    %v913 = vsub.s32 0, %v912
    %v914 = vrot.slane %v908, %v913
    %v915 = vmul.f32 %v726, %v914
    %v916 = vmul.f32 %v731, %v914
    %v917 = vlaneseq
    %v918 = vshrl.u32 %v917, 7
    %v919 = vsub.s32 1, %v918
    %v920 = vrot.slane %v908, %v919
    %v921 = vadd.f32 %v915, %v920
    %v922 = vadd.f32 %v916, %v920
    %v923 = vadd.f32 %v55, %v921
    %v924 = vadd.f32 %v56, %v922
    %925 = vst [vmem:[#allocation7] sm:$0xff] %v923
    %926 = vst [vmem:[#allocation7 + $0x8] sm:$0xff] %v924
    // Predicated region
    $region38: #{tpu_custom_call.1} parent=1 // pred_check
      _
    $region39: #{tpu_custom_call.1} parent=1 // pred_check_branch
      %928 = sbr.rel (0) target = $region41
    $region40: #{tpu_custom_call.1} parent=1 // pred_region
      %s930 = ssub.s32 256, 256
      %931 = vsyncadd [#allocation4], %s930
      %s932 = sshll.u32 [#allocation7], 4
      %s933 = int_to_ptr.vmem [resolvable:$true] %s932
      %938 = dma.vmem_to_hbm [thread:$0]  %s933, 256, %s7, [#allocation4], 128, 128, 8
    $region41: #{tpu_custom_call.1} parent=1 // pred_fallthru
      _
    // Predicated region
    $region42: #{tpu_custom_call.1} parent=1 // pred_check
      _
    $region43: #{tpu_custom_call.1} parent=1 // pred_check_branch
      %940 = sbr.rel (0) target = $region45
    $region44: #{tpu_custom_call.1} parent=1 // pred_region
      %941 = dma.done [#allocation4], 256
    $region45: #{tpu_custom_call.1} parent=1 // pred_fallthru
      _
    %942 = vsyncpa [#allocation3], 1
    %943 = vsyncpa [#allocation6], 1
    %944 = vsyncpa [#allocation4], 1

</llo_original>
